<compile_context>
chip_gen: v6e
topology: v6e:2x2x1
jax: 0.10.0
libtpu: 0.0.40
codegen_flags: <defaults>
</compile_context>

<pallas_src>
import jax
import jax.numpy as jnp
from jax.experimental import pallas as pl
from jax.experimental.pallas import tpu as pltpu

INPUT_DIM = 320
HIDDEN_DIM = 100          # logical hidden dim of the PyTorch module
HIDDEN_DIM_PAD = 128      # lane-aligned (128) padded hidden dim used inside the kernel
OUTPUT_DIM = 2
TILE_B = 1024             # batch tile (MXU-M aligned, multiple of 8)


def _round_up(n, m):
    return ((n + m - 1) // m) * m


def _choose_tile(B):
    """Pick a batch tile: whole batch if tiny, otherwise >= 2 tiles (v7x megacore),
    capped at TILE_B for large batches."""
    Bp8 = _round_up(B, 8)
    if Bp8 <= 8:
        return Bp8
    if Bp8 <= 2 * TILE_B:
        return _round_up((Bp8 + 1) // 2, 8)   # split into two near-equal tiles
    return TILE_B


def mlp_kernel(x_ref, w1_ref, b1_ref, w2_ref, b2_ref, o_ref):
    # Fused per batch-tile: hidden matmul + bias + relu + output matmul + bias.
    x = x_ref[...].astype(jnp.bfloat16)                       # (TILE_B, 320) bf16 MXU input
    h = jnp.dot(x, w1_ref[...],
                preferred_element_type=jnp.float32)           # (TILE_B, 128) f32 acc
    h = jnp.maximum(h + b1_ref[...], 0.0)                     # bias + ReLU on VPU
    o = jnp.dot(h.astype(jnp.bfloat16), w2_ref[...],
                preferred_element_type=jnp.float32)           # (TILE_B, 2) f32 acc
    o_ref[...] = (o + b2_ref[...]).astype(o_ref.dtype)


def mlp_forward(x, w1p, b1p, w2p, b2p):
    """x: (B, INPUT_DIM) f32 or bf16. w1p/b1p/w2p/b2p: padded params (see pad_params)."""
    B = x.shape[0]
    in_dim = x.shape[1]
    hid = w1p.shape[1]
    out_dim = w2p.shape[1]

    tb = _choose_tile(B)
    Bp = _round_up(B, tb)
    if Bp != B:
        x = jnp.pad(x, ((0, Bp - B), (0, 0)))                 # zero rows; sliced off below

    out = pl.pallas_call(
        mlp_kernel,
        out_shape=jax.ShapeDtypeStruct((Bp, out_dim), jnp.float32),
        grid_spec=pltpu.PrefetchScalarGridSpec(
            num_scalar_prefetch=0,
            grid=(Bp // tb,),
            in_specs=[
                pl.BlockSpec((tb, in_dim), lambda i: (i, 0)),       # x: streamed per tile
                pl.BlockSpec((in_dim, hid), lambda i: (0, 0)),      # w1: VMEM-resident
                pl.BlockSpec((1, hid), lambda i: (0, 0)),           # b1: VMEM-resident
                pl.BlockSpec((hid, out_dim), lambda i: (0, 0)),     # w2: VMEM-resident
                pl.BlockSpec((1, out_dim), lambda i: (0, 0)),       # b2: VMEM-resident
            ],
            out_specs=pl.BlockSpec((tb, out_dim), lambda i: (i, 0)),
        ),
        compiler_params=pltpu.CompilerParams(
            dimension_semantics=("parallel",),                 # shards batch across TCs (v7x)
            vmem_limit_bytes=64 * 1024 * 1024),                # headroom if TILE_B is raised
    )(x, w1p, b1p, w2p, b2p)

    return out[:B] if Bp != B else out


def pad_params(w1, b1, w2, b2):
    """Zero-pad the hidden dimension (100 -> 128) for lane alignment and pre-cast the
    weight matrices to bf16 (MXU-native); biases stay f32 (added to f32 accumulators).
    Exact zeros in the padded W1 columns / b1 entries / W2 rows keep semantics identical."""
    hpad = HIDDEN_DIM_PAD - w1.shape[1]
    w1p = jnp.pad(w1, ((0, 0), (0, hpad))).astype(jnp.bfloat16)
    b1p = jnp.pad(b1, ((0, 0), (0, hpad)))
    w2p = jnp.pad(w2, ((0, hpad), (0, 0))).astype(jnp.bfloat16)
    return w1p, b1p, w2p, b2


def init_params(key):
    # Deterministic init mirroring torch.nn.Linear's U(-1/sqrt(fan_in), +1/sqrt(fan_in)).
    k1, k2, k3, k4 = jax.random.split(key, 4)
    bound1 = 1.0 / jnp.sqrt(INPUT_DIM)
    bound2 = 1.0 / jnp.sqrt(HIDDEN_DIM)
    w1 = jax.random.uniform(k1, (INPUT_DIM, HIDDEN_DIM), jnp.float32, -bound1, bound1)
    b1 = jax.random.uniform(k2, (1, HIDDEN_DIM), jnp.float32, -bound1, bound1)
    w2 = jax.random.uniform(k3, (HIDDEN_DIM, OUTPUT_DIM), jnp.float32, -bound2, bound2)
    b2 = jax.random.uniform(k4, (1, OUTPUT_DIM), jnp.float32, -bound2, bound2)
    return w1, b1, w2, b2


if __name__ == "__main__":
    key = jax.random.PRNGKey(0)
    k_params, k_x1, k_x2 = jax.random.split(key, 3)

    w1, b1, w2, b2 = init_params(k_params)
    w1p, b1p, w2p, b2p = pad_params(w1, b1, w2, b2)

    # Small-batch check (single grid step).
    batch = 8
    x = jax.random.normal(k_x1, (batch, INPUT_DIM), jnp.float32)
    out = jax.block_until_ready(mlp_forward(x, w1p, b1p, w2p, b2p))
    ref = jnp.maximum(x @ w1 + b1, 0.0) @ w2 + b2
    assert out.shape == (batch, OUTPUT_DIM)
    # bf16 matmul inputs (f32 accumulation) -> ~1e-3 relative error vs f32 reference.
    assert jnp.allclose(out, ref, atol=3e-2, rtol=3e-2)

    # Larger, non-tile-multiple batch check (exercises the 2-tile grid + padding path).
    batch2 = 300
    x2 = jax.random.normal(k_x2, (batch2, INPUT_DIM), jnp.float32)
    out2 = jax.block_until_ready(mlp_forward(x2, w1p, b1p, w2p, b2p))
    ref2 = jnp.maximum(x2 @ w1 + b1, 0.0) @ w2 + b2
    assert out2.shape == (batch2, OUTPUT_DIM)
    assert jnp.allclose(out2, ref2, atol=3e-2, rtol=3e-2)

    print("KERNEL_OK")
</pallas_src>

<mosaic_0001>
module attributes {stable_mosaic.version = 11 : i64} {
  func.func @mlp_kernel(%arg0: i32, %arg1: memref<8x320xf32, #tpu.memory_space<vmem>>, %arg2: memref<320x128xbf16, #tpu.memory_space<vmem>>, %arg3: memref<1x128xf32, #tpu.memory_space<vmem>>, %arg4: memref<128x2xbf16, #tpu.memory_space<vmem>>, %arg5: memref<1x2xf32, #tpu.memory_space<vmem>>, %arg6: memref<8x2xf32, #tpu.memory_space<vmem>>) attributes {dimension_semantics = [#tpu.dimension_semantics<parallel>], iteration_bounds = array<i64: 1>, scalar_prefetch = 0 : i64, scratch_operands = 0 : i64, tpu.core_type = #tpu.core_type<tc>, window_params = [{transform_indices = @transform_0, window_bounds = array<i64: 8, 320>}, {pipeline_mode = #tpu.pipeline_mode<synchronous>, transform_indices = @transform_1, window_bounds = array<i64: 320, 128>}, {pipeline_mode = #tpu.pipeline_mode<synchronous>, transform_indices = @transform_2, window_bounds = array<i64: 1, 128>}, {pipeline_mode = #tpu.pipeline_mode<synchronous>, transform_indices = @transform_3, window_bounds = array<i64: 128, 2>}, {pipeline_mode = #tpu.pipeline_mode<synchronous>, transform_indices = @transform_4, window_bounds = array<i64: 1, 2>}, {transform_indices = @transform_5, window_bounds = array<i64: 8, 2>}]} {
    %c0 = arith.constant 0 : index
    %c0_0 = arith.constant 0 : index
    %0 = vector.load %arg1[%c0, %c0_0] : memref<8x320xf32, #tpu.memory_space<vmem>>, vector<8x320xf32>
    %1 = arith.truncf %0 : vector<8x320xf32> to vector<8x320xbf16>
    %c0_1 = arith.constant 0 : index
    %c0_2 = arith.constant 0 : index
    %2 = vector.load %arg2[%c0_1, %c0_2] : memref<320x128xbf16, #tpu.memory_space<vmem>>, vector<320x128xbf16>
    %cst = arith.constant dense<0.000000e+00> : vector<8x128xf32>
    %3 = tpu.matmul %1, %2, %cst {dimension_numbers = #tpu.dot_dimension_numbers<[1], [0], [0], [1], [0, 0, 1, 1], [], []>} : vector<8x320xbf16>, vector<320x128xbf16>, vector<8x128xf32> -> vector<8x128xf32>
    %c0_3 = arith.constant 0 : index
    %c0_4 = arith.constant 0 : index
    %4 = vector.load %arg3[%c0_3, %c0_4] : memref<1x128xf32, #tpu.memory_space<vmem>>, vector<1x128xf32>
    %5 = vector.broadcast %4 : vector<1x128xf32> to vector<8x128xf32>
    %6 = arith.addf %3, %5 : vector<8x128xf32>
    %cst_5 = arith.constant 0.000000e+00 : f32
    %7 = vector.broadcast %cst_5 : f32 to vector<8x128xf32>
    %8 = arith.maximumf %6, %7 : vector<8x128xf32>
    %9 = arith.truncf %8 : vector<8x128xf32> to vector<8x128xbf16>
    %c0_6 = arith.constant 0 : index
    %c0_7 = arith.constant 0 : index
    %10 = vector.load %arg4[%c0_6, %c0_7] : memref<128x2xbf16, #tpu.memory_space<vmem>>, vector<128x2xbf16>
    %cst_8 = arith.constant dense<0.000000e+00> : vector<8x2xf32>
    %11 = tpu.matmul %9, %10, %cst_8 {dimension_numbers = #tpu.dot_dimension_numbers<[1], [0], [0], [1], [0, 0, 1, 1], [], []>} : vector<8x128xbf16>, vector<128x2xbf16>, vector<8x2xf32> -> vector<8x2xf32>
    %c0_9 = arith.constant 0 : index
    %c0_10 = arith.constant 0 : index
    %12 = vector.load %arg5[%c0_9, %c0_10] : memref<1x2xf32, #tpu.memory_space<vmem>>, vector<1x2xf32>
    %13 = vector.broadcast %12 : vector<1x2xf32> to vector<8x2xf32>
    %14 = arith.addf %11, %13 : vector<8x2xf32>
    %c0_11 = arith.constant 0 : index
    %c0_12 = arith.constant 0 : index
    %15 = vector.load %arg6[%c0_11, %c0_12] : memref<8x2xf32, #tpu.memory_space<vmem>>, vector<8x2xf32>
    tpu.vector_store %arg6[%c0_11, %c0_12], %14 {strides = array<i32>} : memref<8x2xf32, #tpu.memory_space<vmem>>, vector<8x2xf32>,
    return
  }
  func.func @transform_0(%arg0: i32) -> (i32, i32) {
    %c0_i32 = arith.constant 0 : i32
    %c0_i32_0 = arith.constant 0 : i32
    return %arg0, %c0_i32 : i32, i32
  }
  func.func @transform_1(%arg0: i32) -> (i32, i32) {
    %c0_i32 = arith.constant 0 : i32
    %c0_i32_0 = arith.constant 0 : i32
    %c0_i32_1 = arith.constant 0 : i32
    return %c0_i32, %c0_i32_0 : i32, i32
  }
  func.func @transform_2(%arg0: i32) -> (i32, i32) {
    %c0_i32 = arith.constant 0 : i32
    %c0_i32_0 = arith.constant 0 : i32
    %c0_i32_1 = arith.constant 0 : i32
    return %c0_i32, %c0_i32_0 : i32, i32
  }
  func.func @transform_3(%arg0: i32) -> (i32, i32) {
    %c0_i32 = arith.constant 0 : i32
    %c0_i32_0 = arith.constant 0 : i32
    %c0_i32_1 = arith.constant 0 : i32
    return %c0_i32, %c0_i32_0 : i32, i32
  }
  func.func @transform_4(%arg0: i32) -> (i32, i32) {
    %c0_i32 = arith.constant 0 : i32
    %c0_i32_0 = arith.constant 0 : i32
    %c0_i32_1 = arith.constant 0 : i32
    return %c0_i32, %c0_i32_0 : i32, i32
  }
  func.func @transform_5(%arg0: i32) -> (i32, i32) {
    %c0_i32 = arith.constant 0 : i32
    %c0_i32_0 = arith.constant 0 : i32
    return %arg0, %c0_i32 : i32, i32
  }
}

</mosaic_0001>

<llo_original>
// kernel: tpu_custom_call.1
$region0: #{tpu_custom_call.1}
  #allocation0 [shape = 'u32[]', space=smem, size = 0x4, offset = 0x4, fixed_abs, tag = 'smem constant byte address 0x4 - core index']
  #allocation1 [shape = 'u32[144,128]{1,0:T(1,128)}', space=vmem, size = 0x12000, scoped, tag = 'internal scratch']
  %s0 = inlined_call_operand.vmem [shape: f32[8,320], index: 0, kind: input, shape index: {}]
  %s1 = inlined_call_operand.hbm [shape: bf16[320,128], index: 1, kind: input, shape index: {}]
  %s2 = inlined_call_operand.vmem [shape: f32[1,128], index: 2, kind: input, shape index: {}]
  %s3 = inlined_call_operand.vmem [shape: bf16[128,2], index: 3, kind: input, shape index: {}]
  %s4 = inlined_call_operand.vmem [shape: f32[1,2], index: 4, kind: input, shape index: {}]
  %s5 = inlined_call_operand.vmem [shape: f32[8,2], index: 5, kind: output, shape index: {}]
  %s6 = sld [smem:[#allocation0]]
  $region34: #{tpu_custom_call.1} parent=0
    _
  %s8 = ssub.s32 1, %s6
  %s9 = scalar_select 0, %s8, %s6
  $region1: #{tpu_custom_call.1} parent=0
    #allocation2 [shape = 'u8[81920]{0}', space=vmem, size = 0x14000, scoped, tag = 'input window, operand 1, single buffered']
    #allocation3 [shape = 's32[1]{0}', space=sflag, size = 0x4, scoped, tag = 'scoped memory for tpu_custom_call.1']
    %10 = vsyncpa [#allocation3], 0
    // Predicated region
    $region2: #{tpu_custom_call.1} parent=1 // pred_check
      _
    $region3: #{tpu_custom_call.1} parent=1 // pred_check_branch
      %12 = sbr.rel (0) target = $region5
    $region4: #{tpu_custom_call.1} parent=1 // pred_region
      _
    $region5: #{tpu_custom_call.1} parent=1 // pred_fallthru
      _
    // Predicated region
    $region6: #{tpu_custom_call.1} parent=1 // pred_check
      _
    $region7: #{tpu_custom_call.1} parent=1 // pred_check_branch
      %14 = sbr.rel (0) target = $region9
    $region8: #{tpu_custom_call.1} parent=1 // pred_region
      %s16 = ssub.s32 2560, 2560
      %17 = vsyncadd [#allocation3], %s16
      %s18 = sshll.u32 [#allocation2], 4
      %s19 = int_to_ptr.vmem [resolvable:$true] %s18
      %24 = dma.hbm_to_vmem [thread:$0]  %s1, 2560, %s19, [#allocation3], 64, 64, 4
    $region9: #{tpu_custom_call.1} parent=1 // pred_fallthru
      _
    // Predicated region
    $region10: #{tpu_custom_call.1} parent=1 // pred_check
      _
    $region11: #{tpu_custom_call.1} parent=1 // pred_check_branch
      %26 = sbr.rel (0) target = $region13
    $region12: #{tpu_custom_call.1} parent=1 // pred_region
      _
    $region13: #{tpu_custom_call.1} parent=1 // pred_fallthru
      _
    // Predicated region
    $region14: #{tpu_custom_call.1} parent=1 // pred_check
      _
    $region15: #{tpu_custom_call.1} parent=1 // pred_check_branch
      %28 = sbr.rel (0) target = $region17
    $region16: #{tpu_custom_call.1} parent=1 // pred_region
      _
    $region17: #{tpu_custom_call.1} parent=1 // pred_fallthru
      _
    // Predicated region
    $region18: #{tpu_custom_call.1} parent=1 // pred_check
      _
    $region19: #{tpu_custom_call.1} parent=1 // pred_check_branch
      %30 = sbr.rel (0) target = $region21
    $region20: #{tpu_custom_call.1} parent=1 // pred_region
      _
    $region21: #{tpu_custom_call.1} parent=1 // pred_fallthru
      _
    // Predicated region
    $region22: #{tpu_custom_call.1} parent=1 // pred_check
      _
    $region23: #{tpu_custom_call.1} parent=1 // pred_check_branch
      %32 = sbr.rel (0) target = $region25
    $region24: #{tpu_custom_call.1} parent=1 // pred_region
      %33 = dma.done [#allocation3], 2560
    $region25: #{tpu_custom_call.1} parent=1 // pred_fallthru
      _
    %v35 = vld [vmem:[%s0] sm:$0xff]
    %v36 = vld [vmem:[%s0 + $0x8] sm:$0xff]
    %v37 = vld [vmem:[%s0 + $0x10] sm:$0xff]
    %v38 = vpack.c.bf16 %v35, %v35
    %v39 = vpack.c.bf16 %v36, %v36
    %v40 = vpack.c.bf16 %v37, %v37
    %v41 = vld [vmem:[#allocation2] sm:$0xf]
    %v42 = vld [vmem:[#allocation2 + $0x4] sm:$0xf]
    %v43 = vld [vmem:[#allocation2 + $0x8] sm:$0xf]
    %v44 = vld [vmem:[#allocation2 + $0xc] sm:$0xf]
    %v45 = vld [vmem:[#allocation2 + $0x10] sm:$0xf]
    %v46 = vld [vmem:[#allocation2 + $0x14] sm:$0xf]
    %v47 = vld [vmem:[#allocation2 + $0x18] sm:$0xf]
    %v48 = vld [vmem:[#allocation2 + $0x1c] sm:$0xf]
    %v49 = vld [vmem:[#allocation2 + $0x20] sm:$0xf]
    %v50 = vld [vmem:[#allocation2 + $0x24] sm:$0xf]
    %v51 = vld [vmem:[#allocation2 + $0x28] sm:$0xf]
    %v52 = vld [vmem:[#allocation2 + $0x2c] sm:$0xf]
    %v53 = vld [vmem:[#allocation2 + $0x30] sm:$0xf]
    %v54 = vld [vmem:[#allocation2 + $0x34] sm:$0xf]
    %v55 = vld [vmem:[#allocation2 + $0x38] sm:$0xf]
    %v56 = vld [vmem:[#allocation2 + $0x3c] sm:$0xf]
    %v57 = vld [vmem:[#allocation2 + $0x40] sm:$0xf]
    %v58 = vld [vmem:[#allocation2 + $0x44] sm:$0xf]
    %v59 = vld [vmem:[#allocation2 + $0x48] sm:$0xf]
    %v60 = vld [vmem:[#allocation2 + $0x4c] sm:$0xf]
    %v61 = vld [vmem:[#allocation2 + $0x50] sm:$0xf]
    %v62 = vld [vmem:[#allocation2 + $0x54] sm:$0xf]
    %v63 = vld [vmem:[#allocation2 + $0x58] sm:$0xf]
    %v64 = vld [vmem:[#allocation2 + $0x5c] sm:$0xf]
    %v65 = vld [vmem:[#allocation2 + $0x60] sm:$0xf]
    %v66 = vld [vmem:[#allocation2 + $0x64] sm:$0xf]
    %v67 = vld [vmem:[#allocation2 + $0x68] sm:$0xf]
    %v68 = vld [vmem:[#allocation2 + $0x6c] sm:$0xf]
    %v69 = vld [vmem:[#allocation2 + $0x70] sm:$0xf]
    %v70 = vld [vmem:[#allocation2 + $0x74] sm:$0xf]
    %v71 = vld [vmem:[#allocation2 + $0x78] sm:$0xf]
    %v72 = vld [vmem:[#allocation2 + $0x7c] sm:$0xf]
    %v73 = vld [vmem:[#allocation2 + $0x80] sm:$0xf]
    %v74 = vld [vmem:[#allocation2 + $0x84] sm:$0xf]
    %v75 = vld [vmem:[#allocation2 + $0x88] sm:$0xf]
    %v76 = vld [vmem:[#allocation2 + $0x8c] sm:$0xf]
    %v77 = vld [vmem:[#allocation2 + $0x90] sm:$0xf]
    %v78 = vld [vmem:[#allocation2 + $0x94] sm:$0xf]
    %v79 = vld [vmem:[#allocation2 + $0x98] sm:$0xf]
    %v80 = vld [vmem:[#allocation2 + $0x9c] sm:$0xf]
    %v81 = vld [vmem:[%s2] sm:$0x1]
    %v83 = vlaneseq
    %v84 = vshrl.u32 %v83, 7
    %v85 = vsub.s32 0, %v84
    %v86 = vrot.slane %v81, %v85
    %v128 = vunpack.c.l.b16 %v41
    %v129 = vunpack.c.l.b16 %v42
    %v130 = vunpack.c.l.b16 %v43
    %v131 = vunpack.c.l.b16 %v44
    %v132 = vunpack.c.l.b16 %v45
    %v133 = vunpack.c.l.b16 %v46
    %v134 = vunpack.c.l.b16 %v47
    %v135 = vunpack.c.l.b16 %v48
    %v136 = vunpack.c.l.b16 %v49
    %v137 = vunpack.c.l.b16 %v50
    %v138 = vunpack.c.l.b16 %v51
    %v139 = vunpack.c.l.b16 %v52
    %v140 = vunpack.c.l.b16 %v53
    %v141 = vunpack.c.l.b16 %v54
    %v142 = vunpack.c.l.b16 %v55
    %v143 = vunpack.c.l.b16 %v56
    %v144 = vunpack.c.l.b16 %v57
    %v145 = vunpack.c.l.b16 %v58
    %v146 = vunpack.c.l.b16 %v59
    %v147 = vunpack.c.l.b16 %v60
    %v148 = vunpack.c.l.b16 %v61
    %v149 = vunpack.c.l.b16 %v62
    %v150 = vunpack.c.l.b16 %v63
    %v151 = vunpack.c.l.b16 %v64
    %v152 = vunpack.c.l.b16 %v65
    %v153 = vunpack.c.l.b16 %v66
    %v154 = vunpack.c.l.b16 %v67
    %v155 = vunpack.c.l.b16 %v68
    %v156 = vunpack.c.l.b16 %v69
    %v157 = vunpack.c.l.b16 %v70
    %v158 = vunpack.c.l.b16 %v71
    %v159 = vunpack.c.l.b16 %v72
    %v160 = vunpack.c.l.b16 %v73
    %v161 = vunpack.c.l.b16 %v74
    %v162 = vunpack.c.l.b16 %v75
    %v163 = vunpack.c.l.b16 %v76
    %v164 = vunpack.c.l.b16 %v77
    %v165 = vunpack.c.l.b16 %v78
    %v166 = vunpack.c.l.b16 %v79
    %v167 = vunpack.c.l.b16 %v80
    %v168 = vpack.c.b16 %v129, %v128
    %v169 = vpack.c.b16 %v131, %v130
    %v170 = vpack.c.b16 %v133, %v132
    %v171 = vpack.c.b16 %v135, %v134
    %v172 = vpack.c.b16 %v137, %v136
    %v173 = vpack.c.b16 %v139, %v138
    %v174 = vpack.c.b16 %v141, %v140
    %v175 = vpack.c.b16 %v143, %v142
    %v176 = vpack.c.b16 %v145, %v144
    %v177 = vpack.c.b16 %v147, %v146
    %v178 = vpack.c.b16 %v149, %v148
    %v179 = vpack.c.b16 %v151, %v150
    %v180 = vpack.c.b16 %v153, %v152
    %v181 = vpack.c.b16 %v155, %v154
    %v182 = vpack.c.b16 %v157, %v156
    %v183 = vpack.c.b16 %v159, %v158
    %v184 = vpack.c.b16 %v161, %v160
    %v185 = vpack.c.b16 %v163, %v162
    %v186 = vpack.c.b16 %v165, %v164
    %v187 = vpack.c.b16 %v167, %v166
    %vm208 = vcmask 523264
    %v210 = vsel %vm208, %v40, 0
    %212 = vmatprep.subr.bf16.mxu0 0
    %213 = vmatpush1.bf16.msra.mxu0 %v175
    %214 = vmatprep.subr.bf16.mxu0 0
    %215 = vmatpush1.bf16.msra.mxu0 %v174
    %216 = vmatprep.subr.bf16.mxu0 0
    %217 = vmatpush1.bf16.msra.mxu0 %v173
    %218 = vmatprep.subr.bf16.mxu0 0
    %219 = vmatpush1.bf16.msra.mxu0 %v172
    %220 = vmatprep.subr.bf16.mxu0 0
    %221 = vmatpush1.bf16.msra.mxu0 %v171
    %222 = vmatprep.subr.bf16.mxu0 0
    %223 = vmatpush1.bf16.msra.mxu0 %v170
    %224 = vmatprep.subr.bf16.mxu0 0
    %225 = vmatpush1.bf16.msra.mxu0 %v169
    %226 = vmatprep.subr.bf16.mxu0 0
    %227 = vmatpush1.bf16.msra.mxu0 %v168
    %228 = vmatprep.subr.bf16.mxu0 0
    %229 = vmatpush2.bf16.msra.mxu0 %v183
    %230 = vmatprep.subr.bf16.mxu0 0
    %231 = vmatpush2.bf16.msra.mxu0 %v182
    %232 = vmatprep.subr.bf16.mxu0 0
    %233 = vmatpush2.bf16.msra.mxu0 %v181
    %234 = vmatprep.subr.bf16.mxu0 0
    %235 = vmatpush2.bf16.msra.mxu0 %v180
    %236 = vmatprep.subr.bf16.mxu0 0
    %237 = vmatpush2.bf16.msra.mxu0 %v179
    %238 = vmatprep.subr.bf16.mxu0 0
    %239 = vmatpush2.bf16.msra.mxu0 %v178
    %240 = vmatprep.subr.bf16.mxu0 0
    %241 = vmatpush2.bf16.msra.mxu0 %v177
    %242 = vmatprep.subr.bf16.mxu0 0
    %243 = vmatpush2.bf16.msra.mxu0 %v176
    %244 = vmatprep.mubr.bf16.mxu0 %v39
    %245 = vmatmul.mubr.bf16.gmra.mxu0 %v38
    %v246 = vpop.f32.mrf.mxu0
    %v247 = vadd.f32 %v86, %v246
    %v248 = vpop.f32.mrf.mxu0
    %v249 = vpop.f32.mrf.mxu0
    %v250 = vpop.f32.mrf.mxu0
    %251 = vdwg.mxu0
    %252 = vmatprep.subr.bf16.mxu0 0
    %253 = vmatpush1.bf16.msra.mxu0 0
    %254 = vmatprep.subr.bf16.mxu0 0
    %255 = vmatpush1.bf16.msra.mxu0 0
    %256 = vmatprep.subr.bf16.mxu0 0
    %257 = vmatpush1.bf16.msra.mxu0 0
    %258 = vmatprep.subr.bf16.mxu0 0
    %259 = vmatpush1.bf16.msra.mxu0 0
    %260 = vmatprep.subr.bf16.mxu0 0
    %261 = vmatpush1.bf16.msra.mxu0 %v187
    %262 = vmatprep.subr.bf16.mxu0 0
    %263 = vmatpush1.bf16.msra.mxu0 %v186
    %264 = vmatprep.subr.bf16.mxu0 0
    %265 = vmatpush1.bf16.msra.mxu0 %v185
    %266 = vmatprep.subr.bf16.mxu0 0
    %267 = vmatpush1.bf16.msra.mxu0 %v184
    %268 = vmatprep.subr.bf16.mxu0 0
    %269 = vmatpush2.bf16.msra.mxu0 0
    %270 = vmatprep.subr.bf16.mxu0 0
    %271 = vmatpush2.bf16.msra.mxu0 0
    %272 = vmatprep.subr.bf16.mxu0 0
    %273 = vmatpush2.bf16.msra.mxu0 0
    %274 = vmatprep.subr.bf16.mxu0 0
    %275 = vmatpush2.bf16.msra.mxu0 0
    %276 = vmatprep.subr.bf16.mxu0 0
    %277 = vmatpush2.bf16.msra.mxu0 0
    %278 = vmatprep.subr.bf16.mxu0 0
    %279 = vmatpush2.bf16.msra.mxu0 0
    %280 = vmatprep.subr.bf16.mxu0 0
    %281 = vmatpush2.bf16.msra.mxu0 0
    %282 = vmatprep.subr.bf16.mxu0 0
    %283 = vmatpush2.bf16.msra.mxu0 0
    %284 = vmatprep.mubr.bf16.mxu0 0
    %285 = vmatmul.mubr.bf16.gmra.mxu0 %v210
    %v286 = vpop.f32.mrf.mxu0
    %v287 = vadd.f32 %v247, %v286
    %v288 = vpop.f32.mrf.mxu0
    %v289 = vpop.f32.mrf.mxu0
    %v290 = vpop.f32.mrf.mxu0
    %291 = vdwg.mxu0
    %v292 = vmax.f32 %v287, 0.0
    %v293 = vpack.c.bf16 %v292, %v292
    %v294 = vld [vmem:[%s3] sm:$0xf]
    %v295 = vld [vmem:[%s3 + $0x4] sm:$0xf]
    %v296 = vld [vmem:[%s3 + $0x8] sm:$0xf]
    %v297 = vld [vmem:[%s3 + $0xc] sm:$0xf]
    %v298 = vld [vmem:[%s3 + $0x10] sm:$0xf]
    %v299 = vld [vmem:[%s3 + $0x14] sm:$0xf]
    %v300 = vld [vmem:[%s3 + $0x18] sm:$0xf]
    %v301 = vld [vmem:[%s3 + $0x1c] sm:$0xf]
    %v302 = vld [vmem:[%s3 + $0x20] sm:$0xf]
    %v303 = vld [vmem:[%s3 + $0x24] sm:$0xf]
    %v304 = vld [vmem:[%s3 + $0x28] sm:$0xf]
    %v305 = vld [vmem:[%s3 + $0x2c] sm:$0xf]
    %v306 = vld [vmem:[%s3 + $0x30] sm:$0xf]
    %v307 = vld [vmem:[%s3 + $0x34] sm:$0xf]
    %v308 = vld [vmem:[%s3 + $0x38] sm:$0xf]
    %v309 = vld [vmem:[%s3 + $0x3c] sm:$0xf]
    %v310 = vld [vmem:[%s4] sm:$0x1]
    %v312 = vlaneseq
    %v313 = vshrl.u32 %v312, 7
    %v314 = vsub.s32 0, %v313
    %v315 = vrot.slane %v310, %v314
    %v333 = vunpack.c.l.b16 %v294
    %v334 = vunpack.c.l.b16 %v295
    %v335 = vunpack.c.l.b16 %v296
    %v336 = vunpack.c.l.b16 %v297
    %v337 = vunpack.c.l.b16 %v298
    %v338 = vunpack.c.l.b16 %v299
    %v339 = vunpack.c.l.b16 %v300
    %v340 = vunpack.c.l.b16 %v301
    %v341 = vunpack.c.l.b16 %v302
    %v342 = vunpack.c.l.b16 %v303
    %v343 = vunpack.c.l.b16 %v304
    %v344 = vunpack.c.l.b16 %v305
    %v345 = vunpack.c.l.b16 %v306
    %v346 = vunpack.c.l.b16 %v307
    %v347 = vunpack.c.l.b16 %v308
    %v348 = vunpack.c.l.b16 %v309
    %v349 = vpack.c.b16 %v334, %v333
    %v350 = vpack.c.b16 %v336, %v335
    %v351 = vpack.c.b16 %v338, %v337
    %v352 = vpack.c.b16 %v340, %v339
    %v353 = vpack.c.b16 %v342, %v341
    %v354 = vpack.c.b16 %v344, %v343
    %v355 = vpack.c.b16 %v346, %v345
    %v356 = vpack.c.b16 %v348, %v347
    %365 = vmatprep.subr.bf16.mxu0 0
    %366 = vmatpush1.bf16.msra.mxu0 %v356
    %367 = vmatprep.subr.bf16.mxu0 0
    %368 = vmatpush1.bf16.msra.mxu0 %v355
    %369 = vmatprep.subr.bf16.mxu0 0
    %370 = vmatpush1.bf16.msra.mxu0 %v354
    %371 = vmatprep.subr.bf16.mxu0 0
    %372 = vmatpush1.bf16.msra.mxu0 %v353
    %373 = vmatprep.subr.bf16.mxu0 0
    %374 = vmatpush1.bf16.msra.mxu0 %v352
    %375 = vmatprep.subr.bf16.mxu0 0
    %376 = vmatpush1.bf16.msra.mxu0 %v351
    %377 = vmatprep.subr.bf16.mxu0 0
    %378 = vmatpush1.bf16.msra.mxu0 %v350
    %379 = vmatprep.subr.bf16.mxu0 0
    %380 = vmatpush1.bf16.msra.mxu0 %v349
    %381 = vmatprep.subr.bf16.mxu0 0
    %382 = vmatpush2.bf16.msra.mxu0 0
    %383 = vmatprep.subr.bf16.mxu0 0
    %384 = vmatpush2.bf16.msra.mxu0 0
    %385 = vmatprep.subr.bf16.mxu0 0
    %386 = vmatpush2.bf16.msra.mxu0 0
    %387 = vmatprep.subr.bf16.mxu0 0
    %388 = vmatpush2.bf16.msra.mxu0 0
    %389 = vmatprep.subr.bf16.mxu0 0
    %390 = vmatpush2.bf16.msra.mxu0 0
    %391 = vmatprep.subr.bf16.mxu0 0
    %392 = vmatpush2.bf16.msra.mxu0 0
    %393 = vmatprep.subr.bf16.mxu0 0
    %394 = vmatpush2.bf16.msra.mxu0 0
    %395 = vmatprep.subr.bf16.mxu0 0
    %396 = vmatpush2.bf16.msra.mxu0 0
    %397 = vmatprep.mubr.bf16.mxu0 0
    %398 = vmatmul.mubr.bf16.gmra.mxu0 %v293
    %v399 = vpop.f32.mrf.mxu0
    %v400 = vadd.f32 %v315, %v399
    %v401 = vpop.f32.mrf.mxu0
    %v402 = vpop.f32.mrf.mxu0
    %v403 = vpop.f32.mrf.mxu0
    %404 = vdwg.mxu0
    %vm405 = vcmask 15360
    %406 = vst.msk [vmem:[%s5] sm:$0xff] %vm405, %v400
    // Predicated region
    $region26: #{tpu_custom_call.1} parent=1 // pred_check
      _
    $region27: #{tpu_custom_call.1} parent=1 // pred_check_branch
      %408 = sbr.rel (0) target = $region29
    $region28: #{tpu_custom_call.1} parent=1 // pred_region
      _
    $region29: #{tpu_custom_call.1} parent=1 // pred_fallthru
      _
    // Predicated region
    $region30: #{tpu_custom_call.1} parent=1 // pred_check
      _
    $region31: #{tpu_custom_call.1} parent=1 // pred_check_branch
      %410 = sbr.rel (0) target = $region33
    $region32: #{tpu_custom_call.1} parent=1 // pred_region
      _
    $region33: #{tpu_custom_call.1} parent=1 // pred_fallthru
      _
    %411 = vsyncpa [#allocation3], 1

</llo_original>
